<compile_context>
chip_gen: v6e
topology: v6e:2x2x1
jax: 0.10.0
libtpu: 0.0.40
codegen_flags: <defaults>
</compile_context>

<pallas_src>
import jax
import jax.numpy as jnp
from jax.experimental import pallas as pl
from jax.experimental.pallas import tpu as pltpu


def _flash_attn_kernel(q_ref, k_ref, v_ref, o_ref, m_sc, l_sc, acc_sc):
    """One (batch, q-tile) online-softmax step over one kv tile.

    Shapes (head-major, all heads batched in a single einsum per step):
      q_ref:     (heads, tq,  hd)  bf16, softmax scale pre-folded
      k_ref:     (heads, tkv, hd)  bf16
      v_ref:     (heads, tkv, hd)  bf16
      o_ref:     (heads, tq,  hd)  f32  (written only on the last kv step)
      m_sc/l_sc: (heads, tq,  1)   f32  running max / running sum
      acc_sc:    (heads, tq,  hd)  f32  running context accumulator
    """
    ki = pl.program_id(2)

    @pl.when(ki == 0)
    def _init():
        m_sc[...] = jnp.full(m_sc.shape, -jnp.inf, dtype=m_sc.dtype)
        l_sc[...] = jnp.zeros_like(l_sc)
        acc_sc[...] = jnp.zeros_like(acc_sc)

    q = q_ref[...]
    k = k_ref[...]
    v = v_ref[...]

    # Scores for all heads in one batched MXU op (no per-head Python unroll).
    s = jnp.einsum('hqd,hkd->hqk', q, k,
                   preferred_element_type=jnp.float32)          # (heads, tq, tkv)

    m_prev = m_sc[...]                                          # (heads, tq, 1)
    m_new = jnp.maximum(m_prev, jnp.max(s, axis=-1, keepdims=True))
    alpha = jnp.exp(m_prev - m_new)                             # (heads, tq, 1)
    p = jnp.exp(s - m_new)                                      # (heads, tq, tkv)

    # Full-width, lane-dense scratch updates (no narrow column RMWs).
    l_sc[...] = alpha * l_sc[...] + jnp.sum(p, axis=-1, keepdims=True)
    acc_sc[...] = alpha * acc_sc[...] + jnp.einsum(
        'hqk,hkd->hqd', p.astype(v.dtype), v,
        preferred_element_type=jnp.float32)
    m_sc[...] = m_new

    @pl.when(ki == pl.num_programs(2) - 1)
    def _finalize():
        # Exact reciprocal/divide: once per q-tile, negligible cost.
        o_ref[...] = (acc_sc[...] / l_sc[...]).astype(o_ref.dtype)


def _device_caps():
    """Per-chip tiling caps and VMEM budget."""
    kind = ""
    try:
        kind = jax.devices()[0].device_kind.lower()
    except Exception:
        pass
    if "v5 lite" in kind or "v5e" in kind:
        # 4x128x128 MXU, 128 MiB VMEM, single TensorCore.
        return {"tq_cap": 128, "tkv_cap": 1024, "vmem_cap": 100 * 2**20}
    if "v6" in kind:
        # 2x256x256 MXU, 128 MiB VMEM.
        return {"tq_cap": 256, "tkv_cap": 1024, "vmem_cap": 100 * 2**20}
    # v7x (64 MiB physical VMEM, 2 TCs) or unknown: conservative budget.
    return {"tq_cap": 256, "tkv_cap": 512, "vmem_cap": 48 * 2**20}


def _pick_seq_tile(n, cap):
    """Largest tile <= cap dividing n; prefer multiples of 16 (bf16 sublane
    packing), then 8.  Full-sequence tile only as a last resort."""
    if n <= cap:
        return n
    for align in (16, 8):
        start = cap - (cap % align)
        for t in range(start, align - 1, -align):
            if n % t == 0:
                return t
    # TODO(synk): awkward n with no aligned divisor <= cap; a full-sequence
    # tile may exceed the VMEM budget for very long sequences.
    return n


def _vmem_bytes(shape, itemsize, sublane):
    """Padded VMEM footprint of one buffer (lane dim -> 128, sublane dim)."""
    rows = -(-shape[-2] // sublane) * sublane
    lanes = -(-shape[-1] // 128) * 128
    lead = 1
    for s in shape[:-2]:
        lead *= s
    return lead * rows * lanes * itemsize


def attention_pallas(x, w_q, w_k, w_v, w_o, b_o, heads):
    """Multi-head self-attention matching the PyTorch module forward
    (p=0.0, e=None, mask=None).  x: (b, n, d); w_* are (out, in) Linear weights."""
    b, n, d = x.shape
    assert d % heads == 0
    hd = d // heads
    scale = float(d) ** (-0.5)          # obs_dim ** -0.5, as in the PyTorch module

    caps = _device_caps()
    tq = _pick_seq_tile(n, caps["tq_cap"])
    tkv = _pick_seq_tile(n, caps["tkv_cap"])
    # v7x shards the "parallel" axes over 2 TensorCores; keep the parallel
    # extent >= 2 when possible.
    if b * (n // tq) < 2:
        half = tq // 2
        if half >= 8 and tq % 2 == 0 and n % half == 0:
            tq = half

    bf16 = jnp.bfloat16
    f32 = jnp.float32

    # Q/K/V projections as plain XLA GEMMs: done ONCE (not per q-tile), full-d
    # contraction on the MXU.  Softmax scale folded into Q.  Head-major layout
    # so the flash kernel batches all heads in a single einsum per step.
    xf = x.astype(f32)
    q = (xf @ w_q.T.astype(f32)) * scale
    k = xf @ w_k.T.astype(f32)
    v = xf @ w_v.T.astype(f32)

    def to_heads(t):
        return t.reshape(b, n, heads, hd).transpose(0, 2, 1, 3).astype(bf16)

    qh, kh, vh = to_heads(q), to_heads(k), to_heads(v)

    grid = (b, n // tq, n // tkv)
    q_spec = pl.BlockSpec((None, heads, tq, hd), lambda bi, qi, ki: (bi, 0, qi, 0))
    kv_spec = pl.BlockSpec((None, heads, tkv, hd), lambda bi, qi, ki: (bi, 0, ki, 0))
    o_spec = pl.BlockSpec((None, heads, tq, hd), lambda bi, qi, ki: (bi, 0, qi, 0))

    scratch = [
        pltpu.VMEM((heads, tq, 1), f32),     # online-softmax running max
        pltpu.VMEM((heads, tq, 1), f32),     # online-softmax running sum
        pltpu.VMEM((heads, tq, hd), f32),    # context accumulator
    ]

    # Exact VMEM accounting (double-buffered in/out blocks + scratch) plus
    # headroom, capped per chip (48 MiB on v7x where physical VMEM is 64 MiB).
    est = (2 * _vmem_bytes((heads, tq, hd), 2, 16)      # q blocks (bf16)
           + 4 * _vmem_bytes((heads, tkv, hd), 2, 16)   # k + v blocks (bf16)
           + 2 * _vmem_bytes((heads, tq, hd), 4, 8)     # out blocks (f32)
           + 2 * _vmem_bytes((heads, tq, 1), 4, 8)      # m, l scratch
           + _vmem_bytes((heads, tq, hd), 4, 8))        # acc scratch
    vmem_limit = int(min(caps["vmem_cap"], max(16 * 2**20, 2 * est + 4 * 2**20)))

    n_q_tiles = n // tq
    cost = pl.CostEstimate(
        flops=int(4 * b * heads * n * n * hd),                      # QK^T + PV
        transcendentals=int(b * heads * n * (n + n // tkv)),        # exp(p) + alpha
        bytes_accessed=int(b * heads * n * hd * (2 + 4)             # Q read + ctx write
                           + 2 * n_q_tiles * b * heads * n * hd * 2),  # K/V per q-tile
    )

    ctx = pl.pallas_call(
        _flash_attn_kernel,
        out_shape=jax.ShapeDtypeStruct((b, heads, n, hd), f32),
        grid_spec=pltpu.PrefetchScalarGridSpec(
            num_scalar_prefetch=0,
            grid=grid,
            in_specs=[q_spec, kv_spec, kv_spec],
            out_specs=o_spec,
            scratch_shapes=scratch),
        compiler_params=pltpu.CompilerParams(
            dimension_semantics=("parallel", "parallel", "arbitrary"),
            vmem_limit_bytes=vmem_limit),
        cost_estimate=cost,
    )(qh, kh, vh)

    # Merge heads and apply the output projection (+bias) as a plain XLA GEMM.
    ctx = ctx.transpose(0, 2, 1, 3).reshape(b, n, d)
    out = ctx @ w_o.T.astype(f32) + b_o.astype(f32)
    return out.astype(x.dtype)


def attention_reference(x, w_q, w_k, w_v, w_o, b_o, heads):
    """Pure-JAX f32 reference mirroring the PyTorch forward (p=0, mask=None)."""
    b, n, d = x.shape
    hd = d // heads
    scale = float(d) ** (-0.5)
    q = x @ w_q.T
    k = x @ w_k.T
    v = x @ w_v.T

    def split(t):
        return t.reshape(b, n, heads, hd).transpose(0, 2, 1, 3)  # b h n d

    qh, kh, vh = split(q), split(k), split(v)
    scores = jnp.einsum('bhid,bhjd->bhij', qh, kh) * scale
    att = jax.nn.softmax(scores, axis=-1)
    ctx = jnp.einsum('bhij,bhjd->bhid', att, vh)
    ctx = ctx.transpose(0, 2, 1, 3).reshape(b, n, d)
    return ctx @ w_o.T + b_o


if __name__ == "__main__":
    # Small shapes consistent with the module: batch=2, seq=8, obs_dim=32, heads=4.
    B, N, D, HEADS = 2, 8, 32, 4

    key = jax.random.PRNGKey(0)
    kx, kq, kk, kv, ko, kb = jax.random.split(key, 6)

    x = jax.random.normal(kx, (B, N, D), dtype=jnp.float32)

    # Deterministic parameter init (PyTorch Linear weight shape: (out, in)).
    bound = 1.0 / (D ** 0.5)
    w_q = jax.random.uniform(kq, (D, D), jnp.float32, -bound, bound)
    w_k = jax.random.uniform(kk, (D, D), jnp.float32, -bound, bound)
    w_v = jax.random.uniform(kv, (D, D), jnp.float32, -bound, bound)
    w_o = jax.random.uniform(ko, (D, D), jnp.float32, -bound, bound)
    b_o = jax.random.uniform(kb, (D,), jnp.float32, -bound, bound)

    out = attention_pallas(x, w_q, w_k, w_v, w_o, b_o, HEADS)
    out = jax.block_until_ready(out)

    ref = attention_reference(x, w_q, w_k, w_v, w_o, b_o, HEADS)
    assert out.shape == (B, N, D)
    # bf16 MXU operands (Q/K/V and P) with f32 accumulation -> loose tolerance.
    assert jnp.allclose(out, ref, atol=3e-2, rtol=3e-2), "mismatch vs reference"

    # TODO(synk): drop_attn_mask (stochastic Dropout1d attention masking, p>0),
    # the optional encoder input `e`, and the additive `mask` argument are not
    # implemented; only the p=0.0 self-attention inference path is covered.
    print("KERNEL_OK")
</pallas_src>

<mosaic_0001>
module attributes {stable_mosaic.version = 11 : i64} {
  func.func @_flash_attn_kernel(%arg0: i32, %arg1: i32, %arg2: i32, %arg3: memref<1x4x8x8xbf16, #tpu.memory_space<vmem>>, %arg4: memref<1x4x8x8xbf16, #tpu.memory_space<vmem>>, %arg5: memref<1x4x8x8xbf16, #tpu.memory_space<vmem>>, %arg6: memref<1x4x8x8xf32, #tpu.memory_space<vmem>>, %arg7: memref<4x8x1xf32, #tpu.memory_space<vmem>>, %arg8: memref<4x8x1xf32, #tpu.memory_space<vmem>>, %arg9: memref<4x8x8xf32, #tpu.memory_space<vmem>>) attributes {dimension_semantics = [#tpu.dimension_semantics<parallel>, #tpu.dimension_semantics<parallel>, #tpu.dimension_semantics<arbitrary>], iteration_bounds = array<i64: 2, 1, 1>, scalar_prefetch = 0 : i64, scratch_operands = 3 : i64, tpu.core_type = #tpu.core_type<tc>, window_params = [{transform_indices = @transform_0, window_bounds = array<i64: 1, 4, 8, 8>}, {transform_indices = @transform_1, window_bounds = array<i64: 1, 4, 8, 8>}, {transform_indices = @transform_2, window_bounds = array<i64: 1, 4, 8, 8>}, {transform_indices = @transform_3, window_bounds = array<i64: 1, 4, 8, 8>}]} {
    %c0_i32 = arith.constant 0 : i32
    %0 = arith.cmpi eq, %arg2, %c0_i32 : i32
    %1 = arith.extui %0 : i1 to i32
    %c0_i32_0 = arith.constant 0 : i32
    %2 = arith.cmpi ne, %1, %c0_i32_0 : i32
    scf.if %2 {
      %cst_35 = arith.constant 0xFF800000 : f32
      %36 = vector.broadcast %cst_35 : f32 to vector<4x8x1xf32>
      %c0_36 = arith.constant 0 : index
      %c0_37 = arith.constant 0 : index
      %c0_38 = arith.constant 0 : index
      %37 = vector.load %arg7[%c0_36, %c0_37, %c0_38] : memref<4x8x1xf32, #tpu.memory_space<vmem>>, vector<4x8x1xf32>
      tpu.vector_store %arg7[%c0_36, %c0_37, %c0_38], %36 {strides = array<i32>} : memref<4x8x1xf32, #tpu.memory_space<vmem>>, vector<4x8x1xf32>,
      %cst_39 = arith.constant 0.000000e+00 : f32
      %38 = vector.broadcast %cst_39 : f32 to vector<4x8x1xf32>
      %c0_40 = arith.constant 0 : index
      %c0_41 = arith.constant 0 : index
      %c0_42 = arith.constant 0 : index
      %39 = vector.load %arg8[%c0_40, %c0_41, %c0_42] : memref<4x8x1xf32, #tpu.memory_space<vmem>>, vector<4x8x1xf32>
      tpu.vector_store %arg8[%c0_40, %c0_41, %c0_42], %38 {strides = array<i32>} : memref<4x8x1xf32, #tpu.memory_space<vmem>>, vector<4x8x1xf32>,
      %cst_43 = arith.constant 0.000000e+00 : f32
      %40 = vector.broadcast %cst_43 : f32 to vector<4x8x8xf32>
      %c0_44 = arith.constant 0 : index
      %c0_45 = arith.constant 0 : index
      %c0_46 = arith.constant 0 : index
      %41 = vector.load %arg9[%c0_44, %c0_45, %c0_46] : memref<4x8x8xf32, #tpu.memory_space<vmem>>, vector<4x8x8xf32>
      tpu.vector_store %arg9[%c0_44, %c0_45, %c0_46], %40 {strides = array<i32>} : memref<4x8x8xf32, #tpu.memory_space<vmem>>, vector<4x8x8xf32>,
    } else {
    }
    %c0 = arith.constant 0 : index
    %c0_1 = arith.constant 0 : index
    %c0_2 = arith.constant 0 : index
    %c0_3 = arith.constant 0 : index
    %3 = vector.load %arg3[%c0, %c0_1, %c0_2, %c0_3] : memref<1x4x8x8xbf16, #tpu.memory_space<vmem>>, vector<1x4x8x8xbf16>
    %4 = vector.shape_cast %3 : vector<1x4x8x8xbf16> to vector<4x8x8xbf16>
    %c0_4 = arith.constant 0 : index
    %c0_5 = arith.constant 0 : index
    %c0_6 = arith.constant 0 : index
    %c0_7 = arith.constant 0 : index
    %5 = vector.load %arg4[%c0_4, %c0_5, %c0_6, %c0_7] : memref<1x4x8x8xbf16, #tpu.memory_space<vmem>>, vector<1x4x8x8xbf16>
    %6 = vector.shape_cast %5 : vector<1x4x8x8xbf16> to vector<4x8x8xbf16>
    %c0_8 = arith.constant 0 : index
    %c0_9 = arith.constant 0 : index
    %c0_10 = arith.constant 0 : index
    %c0_11 = arith.constant 0 : index
    %7 = vector.load %arg5[%c0_8, %c0_9, %c0_10, %c0_11] : memref<1x4x8x8xbf16, #tpu.memory_space<vmem>>, vector<1x4x8x8xbf16>
    %8 = vector.shape_cast %7 : vector<1x4x8x8xbf16> to vector<4x8x8xbf16>
    "tpu.trace_start"() <{level = 10 : i32, message = "hqd,hkd->hqk"}> : () -> ()
    %cst = arith.constant dense<0.000000e+00> : vector<4x8x8xf32>
    %9 = tpu.matmul %4, %6, %cst {dimension_numbers = #tpu.dot_dimension_numbers<[2], [2], [1], [1], [0, 0, 0, 1, 1, 1], [0], [0]>} : vector<4x8x8xbf16>, vector<4x8x8xbf16>, vector<4x8x8xf32> -> vector<4x8x8xf32>
    "tpu.trace_stop"() : () -> ()
    %c0_12 = arith.constant 0 : index
    %c0_13 = arith.constant 0 : index
    %c0_14 = arith.constant 0 : index
    %10 = vector.load %arg7[%c0_12, %c0_13, %c0_14] : memref<4x8x1xf32, #tpu.memory_space<vmem>>, vector<4x8x1xf32>
    %cst_15 = arith.constant dense<0xFF800000> : vector<4x8xf32>
    %11 = vector.multi_reduction <maximumf>, %9, %cst_15 [2] : vector<4x8x8xf32> to vector<4x8xf32>
    %12 = vector.shape_cast %11 : vector<4x8xf32> to vector<4x8x1xf32>
    %13 = arith.maximumf %10, %12 : vector<4x8x1xf32>
    %14 = arith.subf %10, %13 : vector<4x8x1xf32>
    %15 = math.exp %14 : vector<4x8x1xf32>
    %16 = vector.broadcast %13 : vector<4x8x1xf32> to vector<4x8x8xf32>
    %17 = arith.subf %9, %16 : vector<4x8x8xf32>
    %18 = math.exp %17 : vector<4x8x8xf32>
    %c0_16 = arith.constant 0 : index
    %c0_17 = arith.constant 0 : index
    %c0_18 = arith.constant 0 : index
    %19 = vector.load %arg8[%c0_16, %c0_17, %c0_18] : memref<4x8x1xf32, #tpu.memory_space<vmem>>, vector<4x8x1xf32>
    %20 = arith.mulf %15, %19 : vector<4x8x1xf32>
    %cst_19 = arith.constant dense<0.000000e+00> : vector<4x8xf32>
    %21 = vector.multi_reduction <add>, %18, %cst_19 [2] : vector<4x8x8xf32> to vector<4x8xf32>
    %22 = vector.shape_cast %21 : vector<4x8xf32> to vector<4x8x1xf32>
    %23 = arith.addf %20, %22 : vector<4x8x1xf32>
    %c0_20 = arith.constant 0 : index
    %c0_21 = arith.constant 0 : index
    %c0_22 = arith.constant 0 : index
    %24 = vector.load %arg8[%c0_20, %c0_21, %c0_22] : memref<4x8x1xf32, #tpu.memory_space<vmem>>, vector<4x8x1xf32>
    tpu.vector_store %arg8[%c0_20, %c0_21, %c0_22], %23 {strides = array<i32>} : memref<4x8x1xf32, #tpu.memory_space<vmem>>, vector<4x8x1xf32>,
    %c0_23 = arith.constant 0 : index
    %c0_24 = arith.constant 0 : index
    %c0_25 = arith.constant 0 : index
    %25 = vector.load %arg9[%c0_23, %c0_24, %c0_25] : memref<4x8x8xf32, #tpu.memory_space<vmem>>, vector<4x8x8xf32>
    %26 = vector.broadcast %15 : vector<4x8x1xf32> to vector<4x8x8xf32>
    %27 = arith.mulf %26, %25 : vector<4x8x8xf32>
    %28 = arith.truncf %18 : vector<4x8x8xf32> to vector<4x8x8xbf16>
    "tpu.trace_start"() <{level = 10 : i32, message = "hqk,hkd->hqd"}> : () -> ()
    %cst_26 = arith.constant dense<0.000000e+00> : vector<4x8x8xf32>
    %29 = tpu.matmul %28, %8, %cst_26 {dimension_numbers = #tpu.dot_dimension_numbers<[2], [1], [1], [2], [0, 0, 0, 1, 1, 2], [0], [0]>} : vector<4x8x8xbf16>, vector<4x8x8xbf16>, vector<4x8x8xf32> -> vector<4x8x8xf32>
    "tpu.trace_stop"() : () -> ()
    %30 = arith.addf %27, %29 : vector<4x8x8xf32>
    %c0_27 = arith.constant 0 : index
    %c0_28 = arith.constant 0 : index
    %c0_29 = arith.constant 0 : index
    %31 = vector.load %arg9[%c0_27, %c0_28, %c0_29] : memref<4x8x8xf32, #tpu.memory_space<vmem>>, vector<4x8x8xf32>
    tpu.vector_store %arg9[%c0_27, %c0_28, %c0_29], %30 {strides = array<i32>} : memref<4x8x8xf32, #tpu.memory_space<vmem>>, vector<4x8x8xf32>,
    %c0_30 = arith.constant 0 : index
    %c0_31 = arith.constant 0 : index
    %c0_32 = arith.constant 0 : index
    %32 = vector.load %arg7[%c0_30, %c0_31, %c0_32] : memref<4x8x1xf32, #tpu.memory_space<vmem>>, vector<4x8x1xf32>
    tpu.vector_store %arg7[%c0_30, %c0_31, %c0_32], %13 {strides = array<i32>} : memref<4x8x1xf32, #tpu.memory_space<vmem>>, vector<4x8x1xf32>,
    %c0_i32_33 = arith.constant 0 : i32
    %33 = arith.cmpi eq, %arg2, %c0_i32_33 : i32
    %34 = arith.extui %33 : i1 to i32
    %c0_i32_34 = arith.constant 0 : i32
    %35 = arith.cmpi ne, %34, %c0_i32_34 : i32
    scf.if %35 {
      %c0_35 = arith.constant 0 : index
      %c0_36 = arith.constant 0 : index
      %c0_37 = arith.constant 0 : index
      %36 = vector.load %arg9[%c0_35, %c0_36, %c0_37] : memref<4x8x8xf32, #tpu.memory_space<vmem>>, vector<4x8x8xf32>
      %c0_38 = arith.constant 0 : index
      %c0_39 = arith.constant 0 : index
      %c0_40 = arith.constant 0 : index
      %37 = vector.load %arg8[%c0_38, %c0_39, %c0_40] : memref<4x8x1xf32, #tpu.memory_space<vmem>>, vector<4x8x1xf32>
      %38 = vector.broadcast %37 : vector<4x8x1xf32> to vector<4x8x8xf32>
      %39 = arith.divf %36, %38 : vector<4x8x8xf32>
      %c0_41 = arith.constant 0 : index
      %c0_42 = arith.constant 0 : index
      %c0_43 = arith.constant 0 : index
      %c0_44 = arith.constant 0 : index
      %40 = vector.load %arg6[%c0_41, %c0_42, %c0_43, %c0_44] : memref<1x4x8x8xf32, #tpu.memory_space<vmem>>, vector<1x4x8x8xf32>
      %41 = vector.shape_cast %40 : vector<1x4x8x8xf32> to vector<4x8x8xf32>
      %42 = vector.shape_cast %39 : vector<4x8x8xf32> to vector<1x4x8x8xf32>
      tpu.vector_store %arg6[%c0_41, %c0_42, %c0_43, %c0_44], %42 {strides = array<i32>} : memref<1x4x8x8xf32, #tpu.memory_space<vmem>>, vector<1x4x8x8xf32>,
    } else {
    }
    return
  }
  func.func @transform_0(%arg0: i32, %arg1: i32, %arg2: i32) -> (i32, i32, i32, i32) {
    %c0_i32 = arith.constant 0 : i32
    %c0_i32_0 = arith.constant 0 : i32
    %c0_i32_1 = arith.constant 0 : i32
    return %arg0, %c0_i32, %arg1, %c0_i32_0 : i32, i32, i32, i32
  }
  func.func @transform_1(%arg0: i32, %arg1: i32, %arg2: i32) -> (i32, i32, i32, i32) {
    %c0_i32 = arith.constant 0 : i32
    %c0_i32_0 = arith.constant 0 : i32
    %c0_i32_1 = arith.constant 0 : i32
    return %arg0, %c0_i32, %arg2, %c0_i32_0 : i32, i32, i32, i32
  }
  func.func @transform_2(%arg0: i32, %arg1: i32, %arg2: i32) -> (i32, i32, i32, i32) {
    %c0_i32 = arith.constant 0 : i32
    %c0_i32_0 = arith.constant 0 : i32
    %c0_i32_1 = arith.constant 0 : i32
    return %arg0, %c0_i32, %arg2, %c0_i32_0 : i32, i32, i32, i32
  }
  func.func @transform_3(%arg0: i32, %arg1: i32, %arg2: i32) -> (i32, i32, i32, i32) {
    %c0_i32 = arith.constant 0 : i32
    %c0_i32_0 = arith.constant 0 : i32
    %c0_i32_1 = arith.constant 0 : i32
    return %arg0, %c0_i32, %arg1, %c0_i32_0 : i32, i32, i32, i32
  }
}

</mosaic_0001>

<llo_original>
// kernel: tpu_custom_call.1
$region0: #{tpu_custom_call.1}
  #allocation0 [shape = 'u32[]', space=smem, size = 0x4, offset = 0x4, fixed_abs, tag = 'smem constant byte address 0x4 - core index']
  #allocation1 [shape = 'u32[144,128]{1,0:T(1,128)}', space=vmem, size = 0x12000, scoped, tag = 'internal scratch']
  #allocation2 [shape = 'f32[4,8,1]{2,1,0:T(8,128)}', space=vmem, size = 0x4000, scoped, tag = 'scratch operand']
  #allocation3 [shape = 'f32[4,8,1]{2,1,0:T(8,128)}', space=vmem, size = 0x4000, scoped, tag = 'scratch operand']
  #allocation4 [shape = 'f32[4,8,8]{2,1,0:T(8,128)}', space=vmem, size = 0x4000, scoped, tag = 'scratch operand']
  %s0 = inlined_call_operand.hbm [shape: bf16[2,4,8,8], index: 0, kind: input, shape index: {}]
  %s1 = inlined_call_operand.hbm [shape: bf16[2,4,8,8], index: 1, kind: input, shape index: {}]
  %s2 = inlined_call_operand.hbm [shape: bf16[2,4,8,8], index: 2, kind: input, shape index: {}]
  %s3 = inlined_call_operand.hbm [shape: f32[2,4,8,8], index: 3, kind: output, shape index: {}]
  %s4 = sld [smem:[#allocation0]]
  $region65: #{tpu_custom_call.1} parent=0
    _
  %s6 = ssub.s32 1, %s4
  %s7 = scalar_select 0, %s6, %s4
  $region1: #{tpu_custom_call.1} parent=0
    #allocation5 [shape = 'u8[16384]{0}', space=vmem, size = 0x4000, scoped, tag = 'input window, operand 0']
    #allocation6 [shape = 's32[2]{0}', space=sflag, size = 0x8, scoped, tag = 'scoped memory for tpu_custom_call.1']
    #allocation7 [shape = 's32[2]{0}', space=sflag, size = 0x8, scoped, tag = 'scoped memory for tpu_custom_call.1']
    #allocation8 [shape = 'u8[16384]{0}', space=vmem, size = 0x4000, scoped, tag = 'input window, operand 1']
    #allocation9 [shape = 's32[2]{0}', space=sflag, size = 0x8, scoped, tag = 'scoped memory for tpu_custom_call.1']
    #allocation10 [shape = 'u8[16384]{0}', space=vmem, size = 0x4000, scoped, tag = 'input window, operand 2']
    #allocation11 [shape = 'u8[32768]{0}', space=vmem, size = 0x8000, scoped, tag = 'output window, operand 0']
    %8 = vsyncpa [#allocation6], 0
    %s9 = scalar_lea.sflag [#allocation6], 1
    %10 = vsyncpa %s9, 0
    %11 = vsyncpa [#allocation9], 0
    %s12 = scalar_lea.sflag [#allocation9], 1
    %13 = vsyncpa %s12, 0
    %14 = vsyncpa [#allocation7], 0
    %s15 = scalar_lea.sflag [#allocation7], 1
    %16 = vsyncpa %s15, 0
    loop: start=0, step=1, limit=4
    $region2: #{tpu_custom_call.1} parent=1 // loop_pre_header
      _
    $region3: #{tpu_custom_call.1} parent=1 // loop_header
      %s18 = sphi 0, %s22
      %p19 = scmp.ge.s32.totalorder %s18, 4
      %s25 = sphi 0, %s44
      %s26 = sphi 0, %s40
      %s27 = sphi 0, %s36
      %s28 = sphi 0, %s25
      %s29 = sphi 0, %s26
      %s30 = sphi 0, %s27
      %s31 = sphi 0, %s28
      %s32 = sphi 0, %s29
      %s33 = sphi 0, %s30
      %s49 = sphi 0, %s51
      %s52 = sphi 0, %s49
      %s53 = sphi 0, %s52
      %s69 = sphi 0, %s53
      %s77 = sphi 0, %s79
      %s80 = sphi 0, %s77
      %s81 = sphi 0, %s80
      %s97 = sphi 0, %s81
      %s105 = sphi 0, %s107
      %s108 = sphi 0, %s105
      %s109 = sphi 0, %s108
      %s125 = sphi 0, %s109
      %s133 = sphi 0, %s135
      %s136 = sphi 0, %s133
      %s137 = sphi 0, %s136
      %s153 = sphi 0, %s137
    $region4: #{tpu_custom_call.1} parent=1 // loop_header_branch
      %21 = sbr.rel (%p19) target = $region8
    $region5: #{tpu_custom_call.1} parent=1 // loop_body
      %s23 = ssub.s32 %s18, 1
      %s24 = ssub.s32 %s18, 2
      %s34 = sadd.s32 1, %s27
      %p35 = scmp.ge.s32.totalorder %s34, 1
      %s36 = scalar_select %p35, 0, %s34
      %s37 = sadd.s32 1, %s26
      %s38 = scalar_select %p35, %s37, %s26
      %p39 = scmp.ge.s32.totalorder %s38, 1
      %s40 = scalar_select %p39, 0, %s38
      %s41 = sadd.s32 1, %s25
      %s42 = scalar_select %p39, %s41, %s25
      %p43 = scmp.ge.s32.totalorder %s42, 2
      %s44 = scalar_select %p43, 0, %s42
      %s45 = ssub.s32 %s25, %s44
      %s46 = ssub.s32 %s26, %s40
      %s47 = sor.u32 %s45, %s46
      %p48 = scmp.eq.s32.totalorder %s47, 0
      %s50 = sadd.s32 %s49, 1
      %s51 = scalar_select %p48, %s49, %s50
      %p54 = pneg %p48
      %p55 = scmp.eq.s32.totalorder %s18, 1
      %p56 = por %p54, %p55
      %p57 = scmp.ne.s32.totalorder %s49, %s52
      %p58 = scmp.eq.s32.totalorder %s18, 0
      %p59 = por %p57, %p58
      %p60 = scmp.ne.s32.totalorder %s49, %s52
      %p61 = scmp.eq.s32.totalorder %s23, 1
      %p62 = por %p60, %p61
      %p63 = scmp.ne.s32.totalorder %s52, %s53
      %p64 = scmp.eq.s32.totalorder %s23, 0
      %p65 = por %p63, %p64
      %p66 = scmp.ne.s32.totalorder %s52, %s53
      %p67 = scmp.eq.s32.totalorder %s24, 1
      %p68 = por %p66, %p67
      %p70 = scmp.ne.s32.totalorder %s53, %s69
      %p71 = scmp.eq.s32.totalorder %s24, 0
      %p72 = por %p70, %p71
      %s73 = ssub.s32 %s25, %s44
      %s74 = ssub.s32 %s27, %s36
      %s75 = sor.u32 %s73, %s74
      %p76 = scmp.eq.s32.totalorder %s75, 0
      %s78 = sadd.s32 %s77, 1
      %s79 = scalar_select %p76, %s77, %s78
      %p82 = pneg %p76
      %p83 = scmp.eq.s32.totalorder %s18, 1
      %p84 = por %p82, %p83
      %p85 = scmp.ne.s32.totalorder %s77, %s80
      %p86 = scmp.eq.s32.totalorder %s18, 0
      %p87 = por %p85, %p86
      %p88 = scmp.ne.s32.totalorder %s77, %s80
      %p89 = scmp.eq.s32.totalorder %s23, 1
      %p90 = por %p88, %p89
      %p91 = scmp.ne.s32.totalorder %s80, %s81
      %p92 = scmp.eq.s32.totalorder %s23, 0
      %p93 = por %p91, %p92
      %p94 = scmp.ne.s32.totalorder %s80, %s81
      %p95 = scmp.eq.s32.totalorder %s24, 1
      %p96 = por %p94, %p95
      %p98 = scmp.ne.s32.totalorder %s81, %s97
      %p99 = scmp.eq.s32.totalorder %s24, 0
      %p100 = por %p98, %p99
      %s101 = ssub.s32 %s25, %s44
      %s102 = ssub.s32 %s27, %s36
      %s103 = sor.u32 %s101, %s102
      %p104 = scmp.eq.s32.totalorder %s103, 0
      %s106 = sadd.s32 %s105, 1
      %s107 = scalar_select %p104, %s105, %s106
      %p110 = pneg %p104
      %p111 = scmp.eq.s32.totalorder %s18, 1
      %p112 = por %p110, %p111
      %p113 = scmp.ne.s32.totalorder %s105, %s108
      %p114 = scmp.eq.s32.totalorder %s18, 0
      %p115 = por %p113, %p114
      %p116 = scmp.ne.s32.totalorder %s105, %s108
      %p117 = scmp.eq.s32.totalorder %s23, 1
      %p118 = por %p116, %p117
      %p119 = scmp.ne.s32.totalorder %s108, %s109
      %p120 = scmp.eq.s32.totalorder %s23, 0
      %p121 = por %p119, %p120
      %p122 = scmp.ne.s32.totalorder %s108, %s109
      %p123 = scmp.eq.s32.totalorder %s24, 1
      %p124 = por %p122, %p123
      %p126 = scmp.ne.s32.totalorder %s109, %s125
      %p127 = scmp.eq.s32.totalorder %s24, 0
      %p128 = por %p126, %p127
      %s129 = ssub.s32 %s25, %s44
      %s130 = ssub.s32 %s26, %s40
      %s131 = sor.u32 %s129, %s130
      %p132 = scmp.eq.s32.totalorder %s131, 0
      %s134 = sadd.s32 %s133, 1
      %s135 = scalar_select %p132, %s133, %s134
      %p138 = pneg %p132
      %p139 = scmp.eq.s32.totalorder %s18, 1
      %p140 = por %p138, %p139
      %p141 = scmp.ne.s32.totalorder %s133, %s136
      %p142 = scmp.eq.s32.totalorder %s18, 0
      %p143 = por %p141, %p142
      %p144 = scmp.ne.s32.totalorder %s133, %s136
      %p145 = scmp.eq.s32.totalorder %s23, 1
      %p146 = por %p144, %p145
      %p147 = scmp.ne.s32.totalorder %s136, %s137
      %p148 = scmp.eq.s32.totalorder %s23, 0
      %p149 = por %p147, %p148
      %p150 = scmp.ne.s32.totalorder %s136, %s137
      %p151 = scmp.eq.s32.totalorder %s24, 1
      %p152 = por %p150, %p151
      %p154 = scmp.ne.s32.totalorder %s137, %s153
      %p155 = scmp.eq.s32.totalorder %s24, 0
      %p156 = por %p154, %p155
      %p157 = scmp.le.s32.totalorder 1, %s18
      %p158 = scmp.lt.s32.totalorder %s18, 3
      %p159 = pnand %p157, %p158
      %p160 = pneg %p159
      // Predicated region
      $region9: #{tpu_custom_call.1} parent=5 // pred_check
        _
      $region10: #{tpu_custom_call.1} parent=5 // pred_check_branch
        %162 = sbr.rel (%p159) target = $region12
      $region11: #{tpu_custom_call.1} parent=5 // pred_region
        %s163 = ssub.s32 %s18, 1
      $region12: #{tpu_custom_call.1} parent=5 // pred_fallthru
        _
      %p164 = scmp.lt.s32.totalorder %s18, 2
      // Predicated region
      $region13: #{tpu_custom_call.1} parent=5 // pred_check
        %p165 = pneg %p164
      $region14: #{tpu_custom_call.1} parent=5 // pred_check_branch
        %167 = sbr.rel (%p165) target = $region16
      $region15: #{tpu_custom_call.1} parent=5 // pred_region
        // Predicated region
        $region17: #{tpu_custom_call.1} parent=15 // pred_check
          %p168 = pneg %p59
        $region18: #{tpu_custom_call.1} parent=15 // pred_check_branch
          %170 = sbr.rel (%p168) target = $region20
        $region19: #{tpu_custom_call.1} parent=15 // pred_region
          %s171 = sand.u32 %s49, 1
          %s172 = scalar_lea.sflag [#allocation6], %s171
          %s173 = sand.u32 %s49, 1
          %s174 = smul.addr %s173, 16
          %s175 = scalar_lea.vmem [#allocation5], %s174
          %s177 = ssub.s32 256, 256
          %178 = vsyncadd %s172, %s177
          %s179 = smul.addr %s25, 4
          %s180 = sadd.s32 %s26, %s179
          %s181 = smul.addr %s180, 64
          %s182 = scalar_lea.hbm %s0, %s181
          %s183 = sshll.u32 %s175, 4
          %s184 = int_to_ptr.vmem [resolvable:$true] %s183
          %189 = dma.hbm_to_vmem [thread:$0]  %s182, 256, %s184, %s172, 64, 64, 4
        $region20: #{tpu_custom_call.1} parent=15 // pred_fallthru
          _
        // Predicated region
        $region21: #{tpu_custom_call.1} parent=15 // pred_check
          %p190 = pneg %p87
        $region22: #{tpu_custom_call.1} parent=15 // pred_check_branch
          %192 = sbr.rel (%p190) target = $region24
        $region23: #{tpu_custom_call.1} parent=15 // pred_region
          %s193 = sand.u32 %s18, 1
          %s194 = scalar_lea.sflag [#allocation9], %s193
          %s195 = sand.u32 %s77, 1
          %s196 = smul.addr %s195, 16
          %s197 = scalar_lea.vmem [#allocation8], %s196
          %s199 = ssub.s32 256, 256
          %200 = vsyncadd %s194, %s199
          %s201 = smul.addr %s25, 4
          %s202 = sadd.s32 %s27, %s201
          %s203 = smul.addr %s202, 64
          %s204 = scalar_lea.hbm %s1, %s203
          %s205 = sshll.u32 %s197, 4
          %s206 = int_to_ptr.vmem [resolvable:$true] %s205
          %211 = dma.hbm_to_vmem [thread:$0]  %s204, 256, %s206, %s194, 64, 64, 4
        $region24: #{tpu_custom_call.1} parent=15 // pred_fallthru
          _
        // Predicated region
        $region25: #{tpu_custom_call.1} parent=15 // pred_check
          %p212 = pneg %p115
        $region26: #{tpu_custom_call.1} parent=15 // pred_check_branch
          %214 = sbr.rel (%p212) target = $region28
        $region27: #{tpu_custom_call.1} parent=15 // pred_region
          %s215 = sand.u32 %s18, 1
          %s216 = scalar_lea.sflag [#allocation9], %s215
          %s217 = sand.u32 %s105, 1
          %s218 = smul.addr %s217, 16
          %s219 = scalar_lea.vmem [#allocation10], %s218
          %s221 = ssub.s32 256, 256
          %222 = vsyncadd %s216, %s221
          %s223 = smul.addr %s25, 4
          %s224 = sadd.s32 %s27, %s223
          %s225 = smul.addr %s224, 64
          %s226 = scalar_lea.hbm %s2, %s225
          %s227 = sshll.u32 %s219, 4
          %s228 = int_to_ptr.vmem [resolvable:$true] %s227
          %233 = dma.hbm_to_vmem [thread:$0]  %s226, 256, %s228, %s216, 64, 64, 4
        $region28: #{tpu_custom_call.1} parent=15 // pred_fallthru
          _
      $region16: #{tpu_custom_call.1} parent=5 // pred_fallthru
        _
      %p234 = scmp.le.s32.totalorder 1, %s18
      %p235 = scmp.lt.s32.totalorder %s18, 3
      %p236 = pnand %p234, %p235
      %p237 = pneg %p236
      // Predicated region
      $region29: #{tpu_custom_call.1} parent=5 // pred_check
        _
      $region30: #{tpu_custom_call.1} parent=5 // pred_check_branch
        %239 = sbr.rel (%p236) target = $region32
      $region31: #{tpu_custom_call.1} parent=5 // pred_region
        %s240 = ssub.s32 %s18, 1
        %s241 = sand.u32 %s52, 1
        %s242 = scalar_lea.sflag [#allocation6], %s241
        %s243 = sand.u32 %s52, 1
        %s244 = smul.addr %s243, 16
        %s245 = scalar_lea.vmem [#allocation5], %s244
        // Predicated region
        $region33: #{tpu_custom_call.1} parent=31 // pred_check
          %p246 = pneg %p65
        $region34: #{tpu_custom_call.1} parent=31 // pred_check_branch
          %248 = sbr.rel (%p246) target = $region36
        $region35: #{tpu_custom_call.1} parent=31 // pred_region
          %249 = dma.done %s242, 256
        $region36: #{tpu_custom_call.1} parent=31 // pred_fallthru
          _
        %s250 = sand.u32 %s23, 1
        %s251 = scalar_lea.sflag [#allocation9], %s250
        %s252 = sand.u32 %s80, 1
        %s253 = smul.addr %s252, 16
        %s254 = scalar_lea.vmem [#allocation8], %s253
        // Predicated region
        $region37: #{tpu_custom_call.1} parent=31 // pred_check
          %p255 = pneg %p93
        $region38: #{tpu_custom_call.1} parent=31 // pred_check_branch
          %257 = sbr.rel (%p255) target = $region40
        $region39: #{tpu_custom_call.1} parent=31 // pred_region
          %258 = dma.done %s251, 256
        $region40: #{tpu_custom_call.1} parent=31 // pred_fallthru
          _
        %s259 = sand.u32 %s23, 1
        %s260 = scalar_lea.sflag [#allocation9], %s259
        %s261 = sand.u32 %s108, 1
        %s262 = smul.addr %s261, 16
        %s263 = scalar_lea.vmem [#allocation10], %s262
        // Predicated region
        $region41: #{tpu_custom_call.1} parent=31 // pred_check
          %p264 = pneg %p121
        $region42: #{tpu_custom_call.1} parent=31 // pred_check_branch
          %266 = sbr.rel (%p264) target = $region44
        $region43: #{tpu_custom_call.1} parent=31 // pred_region
          %267 = dma.done %s260, 256
        $region44: #{tpu_custom_call.1} parent=31 // pred_fallthru
          _
        %s268 = sand.u32 %s52, 1
        %s269 = scalar_lea.sflag [#allocation6], %s268
        %s270 = sand.u32 %s52, 1
        %s271 = smul.addr %s270, 16
        %s272 = scalar_lea.vmem [#allocation5], %s271
        %p273 = pneg %p65
        %p274 = pneg %p62
        %s275 = sand.u32 %s23, 1
        %s276 = scalar_lea.sflag [#allocation9], %s275
        %s277 = sand.u32 %s80, 1
        %s278 = smul.addr %s277, 16
        %s279 = scalar_lea.vmem [#allocation8], %s278
        %p280 = pneg %p93
        %p281 = pneg %p90
        %s282 = sand.u32 %s23, 1
        %s283 = scalar_lea.sflag [#allocation9], %s282
        %s284 = sand.u32 %s108, 1
        %s285 = smul.addr %s284, 16
        %s286 = scalar_lea.vmem [#allocation10], %s285
        %p287 = pneg %p121
        %p288 = pneg %p118
        %p289 = pneg %p149
        %p290 = pneg %p146
        %s291 = sand.u32 %s136, 1
        %s292 = scalar_lea.sflag [#allocation7], %s291
        %s293 = sand.u32 %s136, 1
        %s294 = smul.addr %s293, 32
        %s295 = scalar_lea.vmem [#allocation11], %s294
        %p297 = scmp.eq.s32.totalorder %s30, 0
        // Predicated region
        $region45: #{tpu_custom_call.1} parent=31 // pred_check
          %p298 = pneg %p297
        $region46: #{tpu_custom_call.1} parent=31 // pred_check_branch
          %300 = sbr.rel (%p298) target = $region48
        $region47: #{tpu_custom_call.1} parent=31 // pred_region
          %vm301 = vcmask 7168
          %302 = vst.msk [vmem:[#allocation2] sm:$0xff] %vm301, -inf
          %303 = vst.msk [vmem:[#allocation2 + $0x8] sm:$0xff] %vm301, -inf
          %304 = vst.msk [vmem:[#allocation2 + $0x10] sm:$0xff] %vm301, -inf
          %305 = vst.msk [vmem:[#allocation2 + $0x18] sm:$0xff] %vm301, -inf
          %306 = vst.msk [vmem:[#allocation3] sm:$0xff] %vm301, 0.0
          %307 = vst.msk [vmem:[#allocation3 + $0x8] sm:$0xff] %vm301, 0.0
          %308 = vst.msk [vmem:[#allocation3 + $0x10] sm:$0xff] %vm301, 0.0
          %309 = vst.msk [vmem:[#allocation3 + $0x18] sm:$0xff] %vm301, 0.0
          %vm310 = vcmask 64512
          %311 = vst.msk [vmem:[#allocation4] sm:$0xff] %vm310, 0.0
          %312 = vst.msk [vmem:[#allocation4 + $0x8] sm:$0xff] %vm310, 0.0
          %313 = vst.msk [vmem:[#allocation4 + $0x10] sm:$0xff] %vm310, 0.0
          %314 = vst.msk [vmem:[#allocation4 + $0x18] sm:$0xff] %vm310, 0.0
        $region48: #{tpu_custom_call.1} parent=31 // pred_fallthru
          _
        %v315 = vld [vmem:[%s245] sm:$0xf]
        %v316 = vld [vmem:[%s245 + $0x4] sm:$0xf]
        %v317 = vld [vmem:[%s245 + $0x8] sm:$0xf]
        %v318 = vld [vmem:[%s245 + $0xc] sm:$0xf]
        %v319 = vld [vmem:[%s254] sm:$0xf]
        %v320 = vld [vmem:[%s254 + $0x4] sm:$0xf]
        %v321 = vld [vmem:[%s254 + $0x8] sm:$0xf]
        %v322 = vld [vmem:[%s254 + $0xc] sm:$0xf]
        %v323 = vld [vmem:[%s263] sm:$0xf]
        %v324 = vld [vmem:[%s263 + $0x4] sm:$0xf]
        %v325 = vld [vmem:[%s263 + $0x8] sm:$0xf]
        %v326 = vld [vmem:[%s263 + $0xc] sm:$0xf]
        %vm327 = vcmask 64512
        %v329 = vsel %vm327, %v315, 0
        %v332 = vsel %vm327, %v319, 0
        %334 = vmatprep.subr.bf16.mxu0 0
        %335 = vmatpush1.bf16.xpose.msra.mxu0 0
        %336 = vmatprep.subr.bf16.mxu0 0
        %337 = vmatpush1.bf16.xpose.msra.mxu0 0
        %338 = vmatprep.subr.bf16.mxu0 0
        %339 = vmatpush1.bf16.xpose.msra.mxu0 0
        %340 = vmatprep.subr.bf16.mxu0 0
        %341 = vmatpush1.bf16.xpose.msra.mxu0 0
        %342 = vmatprep.subr.bf16.mxu0 0
        %343 = vmatpush1.bf16.xpose.msra.mxu0 0
        %344 = vmatprep.subr.bf16.mxu0 0
        %345 = vmatpush1.bf16.xpose.msra.mxu0 0
        %346 = vmatprep.subr.bf16.mxu0 0
        %347 = vmatpush1.bf16.xpose.msra.mxu0 0
        %348 = vmatprep.subr.bf16.mxu0 0
        %349 = vmatpush1.bf16.xpose.msra.mxu0 %v332
        %350 = vmatprep.subr.bf16.mxu0 0
        %351 = vmatpush2.bf16.xpose.msra.mxu0 0
        %352 = vmatprep.subr.bf16.mxu0 0
        %353 = vmatpush2.bf16.xpose.msra.mxu0 0
        %354 = vmatprep.subr.bf16.mxu0 0
        %355 = vmatpush2.bf16.xpose.msra.mxu0 0
        %356 = vmatprep.subr.bf16.mxu0 0
        %357 = vmatpush2.bf16.xpose.msra.mxu0 0
        %358 = vmatprep.subr.bf16.mxu0 0
        %359 = vmatpush2.bf16.xpose.msra.mxu0 0
        %360 = vmatprep.subr.bf16.mxu0 0
        %361 = vmatpush2.bf16.xpose.msra.mxu0 0
        %362 = vmatprep.subr.bf16.mxu0 0
        %363 = vmatpush2.bf16.xpose.msra.mxu0 0
        %364 = vmatprep.subr.bf16.mxu0 0
        %365 = vmatpush2.bf16.xpose.msra.mxu0 0
        %366 = vmatprep.mubr.bf16.mxu0 0
        %367 = vmatmul.mubr.bf16.gmra.mxu0 %v329
        %v368 = vpop.f32.mrf.mxu0
        %v369 = vadd.f32 0.0, %v368
        %v370 = vpop.f32.mrf.mxu0
        %v371 = vpop.f32.mrf.mxu0
        %v372 = vpop.f32.mrf.mxu0
        %373 = vdwg.mxu0
        %v375 = vsel %vm327, %v316, 0
        %v378 = vsel %vm327, %v320, 0
        %380 = vmatprep.subr.bf16.mxu0 0
        %381 = vmatpush1.bf16.xpose.msra.mxu0 0
        %382 = vmatprep.subr.bf16.mxu0 0
        %383 = vmatpush1.bf16.xpose.msra.mxu0 0
        %384 = vmatprep.subr.bf16.mxu0 0
        %385 = vmatpush1.bf16.xpose.msra.mxu0 0
        %386 = vmatprep.subr.bf16.mxu0 0
        %387 = vmatpush1.bf16.xpose.msra.mxu0 0
        %388 = vmatprep.subr.bf16.mxu0 0
        %389 = vmatpush1.bf16.xpose.msra.mxu0 0
        %390 = vmatprep.subr.bf16.mxu0 0
        %391 = vmatpush1.bf16.xpose.msra.mxu0 0
        %392 = vmatprep.subr.bf16.mxu0 0
        %393 = vmatpush1.bf16.xpose.msra.mxu0 0
        %394 = vmatprep.subr.bf16.mxu0 0
        %395 = vmatpush1.bf16.xpose.msra.mxu0 %v378
        %396 = vmatprep.subr.bf16.mxu0 0
        %397 = vmatpush2.bf16.xpose.msra.mxu0 0
        %398 = vmatprep.subr.bf16.mxu0 0
        %399 = vmatpush2.bf16.xpose.msra.mxu0 0
        %400 = vmatprep.subr.bf16.mxu0 0
        %401 = vmatpush2.bf16.xpose.msra.mxu0 0
        %402 = vmatprep.subr.bf16.mxu0 0
        %403 = vmatpush2.bf16.xpose.msra.mxu0 0
        %404 = vmatprep.subr.bf16.mxu0 0
        %405 = vmatpush2.bf16.xpose.msra.mxu0 0
        %406 = vmatprep.subr.bf16.mxu0 0
        %407 = vmatpush2.bf16.xpose.msra.mxu0 0
        %408 = vmatprep.subr.bf16.mxu0 0
        %409 = vmatpush2.bf16.xpose.msra.mxu0 0
        %410 = vmatprep.subr.bf16.mxu0 0
        %411 = vmatpush2.bf16.xpose.msra.mxu0 0
        %412 = vmatprep.mubr.bf16.mxu0 0
        %413 = vmatmul.mubr.bf16.gmra.mxu0 %v375
        %v414 = vpop.f32.mrf.mxu0
        %v415 = vadd.f32 0.0, %v414
        %v416 = vpop.f32.mrf.mxu0
        %v417 = vpop.f32.mrf.mxu0
        %v418 = vpop.f32.mrf.mxu0
        %419 = vdwg.mxu0
        %v421 = vsel %vm327, %v317, 0
        %v424 = vsel %vm327, %v321, 0
        %426 = vmatprep.subr.bf16.mxu0 0
        %427 = vmatpush1.bf16.xpose.msra.mxu0 0
        %428 = vmatprep.subr.bf16.mxu0 0
        %429 = vmatpush1.bf16.xpose.msra.mxu0 0
        %430 = vmatprep.subr.bf16.mxu0 0
        %431 = vmatpush1.bf16.xpose.msra.mxu0 0
        %432 = vmatprep.subr.bf16.mxu0 0
        %433 = vmatpush1.bf16.xpose.msra.mxu0 0
        %434 = vmatprep.subr.bf16.mxu0 0
        %435 = vmatpush1.bf16.xpose.msra.mxu0 0
        %436 = vmatprep.subr.bf16.mxu0 0
        %437 = vmatpush1.bf16.xpose.msra.mxu0 0
        %438 = vmatprep.subr.bf16.mxu0 0
        %439 = vmatpush1.bf16.xpose.msra.mxu0 0
        %440 = vmatprep.subr.bf16.mxu0 0
        %441 = vmatpush1.bf16.xpose.msra.mxu0 %v424
        %442 = vmatprep.subr.bf16.mxu0 0
        %443 = vmatpush2.bf16.xpose.msra.mxu0 0
        %444 = vmatprep.subr.bf16.mxu0 0
        %445 = vmatpush2.bf16.xpose.msra.mxu0 0
        %446 = vmatprep.subr.bf16.mxu0 0
        %447 = vmatpush2.bf16.xpose.msra.mxu0 0
        %448 = vmatprep.subr.bf16.mxu0 0
        %449 = vmatpush2.bf16.xpose.msra.mxu0 0
        %450 = vmatprep.subr.bf16.mxu0 0
        %451 = vmatpush2.bf16.xpose.msra.mxu0 0
        %452 = vmatprep.subr.bf16.mxu0 0
        %453 = vmatpush2.bf16.xpose.msra.mxu0 0
        %454 = vmatprep.subr.bf16.mxu0 0
        %455 = vmatpush2.bf16.xpose.msra.mxu0 0
        %456 = vmatprep.subr.bf16.mxu0 0
        %457 = vmatpush2.bf16.xpose.msra.mxu0 0
        %458 = vmatprep.mubr.bf16.mxu0 0
        %459 = vmatmul.mubr.bf16.gmra.mxu0 %v421
        %v460 = vpop.f32.mrf.mxu0
        %v461 = vadd.f32 0.0, %v460
        %v462 = vpop.f32.mrf.mxu0
        %v463 = vpop.f32.mrf.mxu0
        %v464 = vpop.f32.mrf.mxu0
        %465 = vdwg.mxu0
        %v467 = vsel %vm327, %v318, 0
        %v470 = vsel %vm327, %v322, 0
        %472 = vmatprep.subr.bf16.mxu0 0
        %473 = vmatpush1.bf16.xpose.msra.mxu0 0
        %474 = vmatprep.subr.bf16.mxu0 0
        %475 = vmatpush1.bf16.xpose.msra.mxu0 0
        %476 = vmatprep.subr.bf16.mxu0 0
        %477 = vmatpush1.bf16.xpose.msra.mxu0 0
        %478 = vmatprep.subr.bf16.mxu0 0
        %479 = vmatpush1.bf16.xpose.msra.mxu0 0
        %480 = vmatprep.subr.bf16.mxu0 0
        %481 = vmatpush1.bf16.xpose.msra.mxu0 0
        %482 = vmatprep.subr.bf16.mxu0 0
        %483 = vmatpush1.bf16.xpose.msra.mxu0 0
        %484 = vmatprep.subr.bf16.mxu0 0
        %485 = vmatpush1.bf16.xpose.msra.mxu0 0
        %486 = vmatprep.subr.bf16.mxu0 0
        %487 = vmatpush1.bf16.xpose.msra.mxu0 %v470
        %488 = vmatprep.subr.bf16.mxu0 0
        %489 = vmatpush2.bf16.xpose.msra.mxu0 0
        %490 = vmatprep.subr.bf16.mxu0 0
        %491 = vmatpush2.bf16.xpose.msra.mxu0 0
        %492 = vmatprep.subr.bf16.mxu0 0
        %493 = vmatpush2.bf16.xpose.msra.mxu0 0
        %494 = vmatprep.subr.bf16.mxu0 0
        %495 = vmatpush2.bf16.xpose.msra.mxu0 0
        %496 = vmatprep.subr.bf16.mxu0 0
        %497 = vmatpush2.bf16.xpose.msra.mxu0 0
        %498 = vmatprep.subr.bf16.mxu0 0
        %499 = vmatpush2.bf16.xpose.msra.mxu0 0
        %500 = vmatprep.subr.bf16.mxu0 0
        %501 = vmatpush2.bf16.xpose.msra.mxu0 0
        %502 = vmatprep.subr.bf16.mxu0 0
        %503 = vmatpush2.bf16.xpose.msra.mxu0 0
        %504 = vmatprep.mubr.bf16.mxu0 0
        %505 = vmatmul.mubr.bf16.gmra.mxu0 %v467
        %v506 = vpop.f32.mrf.mxu0
        %v507 = vadd.f32 0.0, %v506
        %v508 = vpop.f32.mrf.mxu0
        %v509 = vpop.f32.mrf.mxu0
        %v510 = vpop.f32.mrf.mxu0
        %511 = vdwg.mxu0
        %v512 = vld [vmem:[#allocation2] sm:$0xff]
        %v513 = vld [vmem:[#allocation2 + $0x8] sm:$0xff]
        %v514 = vld [vmem:[#allocation2 + $0x10] sm:$0xff]
        %v515 = vld [vmem:[#allocation2 + $0x18] sm:$0xff]
        %v516 = vsel %vm327, %v369, -inf
        %517 = vmax.xlane.f32.xlu0 %v516
        %v518 = vpop.xlane.xlu0 %517
        %v519 = vsel %vm327, %v415, -inf
        %520 = vmax.xlane.f32.xlu0 %v519
        %v521 = vpop.xlane.xlu0 %520
        %v522 = vsel %vm327, %v461, -inf
        %523 = vmax.xlane.f32.xlu0 %v522
        %v524 = vpop.xlane.xlu0 %523
        %v525 = vsel %vm327, %v507, -inf
        %526 = vmax.xlane.f32.xlu0 %v525
        %v527 = vpop.xlane.xlu0 %526
        %v528 = vmax.f32 %v512, %v518
        %v529 = vmax.f32 %v513, %v521
        %v530 = vmax.f32 %v514, %v524
        %v531 = vmax.f32 %v515, %v527
        %v532 = vsub.f32 %v512, %v528
        %v533 = vsub.f32 %v513, %v529
        %v534 = vsub.f32 %v514, %v530
        %v535 = vsub.f32 %v515, %v531
        %v536 = vmul.f32 %v532, 1.442695
        %v537 = vpow.pop %v536
        %v538 = vmul.f32 %v533, 1.442695
        %v539 = vpow.pop %v538
        %v540 = vmul.f32 %v534, 1.442695
        %v541 = vpow.pop %v540
        %v542 = vmul.f32 %v535, 1.442695
        %v543 = vpow.pop %v542
        %545 = vset.pattern.permute.xlu0 0
        %546 = vperm.xlu0 %545, %v528
        %v547 = vpop.permute.xlu0 %546
        %550 = vset.pattern.permute.xlu0 0
        %551 = vperm.xlu0 %550, %v529
        %v552 = vpop.permute.xlu0 %551
        %555 = vset.pattern.permute.xlu0 0
        %556 = vperm.xlu0 %555, %v530
        %v557 = vpop.permute.xlu0 %556
        %560 = vset.pattern.permute.xlu0 0
        %561 = vperm.xlu0 %560, %v531
        %v562 = vpop.permute.xlu0 %561
        %v564 = vsub.f32 %v369, %v547
        %v565 = vsub.f32 %v415, %v552
        %v566 = vsub.f32 %v461, %v557
        %v567 = vsub.f32 %v507, %v562
        %v568 = vmul.f32 %v564, 1.442695
        %v569 = vpow.pop %v568
        %v570 = vmul.f32 %v565, 1.442695
        %v571 = vpow.pop %v570
        %v572 = vmul.f32 %v566, 1.442695
        %v573 = vpow.pop %v572
        %v574 = vmul.f32 %v567, 1.442695
        %v575 = vpow.pop %v574
        %v576 = vld [vmem:[#allocation3] sm:$0xff]
        %v577 = vld [vmem:[#allocation3 + $0x8] sm:$0xff]
        %v578 = vld [vmem:[#allocation3 + $0x10] sm:$0xff]
        %v579 = vld [vmem:[#allocation3 + $0x18] sm:$0xff]
        %v580 = vmul.f32 %v537, %v576
        %v581 = vmul.f32 %v539, %v577
        %v582 = vmul.f32 %v541, %v578
        %v583 = vmul.f32 %v543, %v579
        %v584 = vsel %vm327, %v569, 0.0
        %585 = vadd.xlane.f32.xlu0 %v584
        %v586 = vpop.xlane.xlu0 %585
        %v587 = vsel %vm327, %v571, 0.0
        %588 = vadd.xlane.f32.xlu0 %v587
        %v589 = vpop.xlane.xlu0 %588
        %v590 = vsel %vm327, %v573, 0.0
        %591 = vadd.xlane.f32.xlu0 %v590
        %v592 = vpop.xlane.xlu0 %591
        %v593 = vsel %vm327, %v575, 0.0
        %594 = vadd.xlane.f32.xlu0 %v593
        %v595 = vpop.xlane.xlu0 %594
        %v596 = vadd.f32 %v580, %v586
        %v597 = vadd.f32 %v581, %v589
        %v598 = vadd.f32 %v582, %v592
        %v599 = vadd.f32 %v583, %v595
        %vm600 = vcmask 7168
        %601 = vst.msk [vmem:[#allocation3] sm:$0xff] %vm600, %v596
        %602 = vst.msk [vmem:[#allocation3 + $0x8] sm:$0xff] %vm600, %v597
        %603 = vst.msk [vmem:[#allocation3 + $0x10] sm:$0xff] %vm600, %v598
        %604 = vst.msk [vmem:[#allocation3 + $0x18] sm:$0xff] %vm600, %v599
        %v605 = vld [vmem:[#allocation4] sm:$0xff]
        %v606 = vld [vmem:[#allocation4 + $0x8] sm:$0xff]
        %v607 = vld [vmem:[#allocation4 + $0x10] sm:$0xff]
        %v608 = vld [vmem:[#allocation4 + $0x18] sm:$0xff]
        %610 = vset.pattern.permute.xlu0 0
        %611 = vperm.xlu0 %610, %v537
        %v612 = vpop.permute.xlu0 %611
        %615 = vset.pattern.permute.xlu0 0
        %616 = vperm.xlu0 %615, %v539
        %v617 = vpop.permute.xlu0 %616
        %620 = vset.pattern.permute.xlu0 0
        %621 = vperm.xlu0 %620, %v541
        %v622 = vpop.permute.xlu0 %621
        %625 = vset.pattern.permute.xlu0 0
        %626 = vperm.xlu0 %625, %v543
        %v627 = vpop.permute.xlu0 %626
        %v629 = vmul.f32 %v612, %v605
        %v630 = vmul.f32 %v617, %v606
        %v631 = vmul.f32 %v622, %v607
        %v632 = vmul.f32 %v627, %v608
        %v633 = vpack.c.bf16 %v569, %v569
        %v634 = vpack.c.bf16 %v571, %v571
        %v635 = vpack.c.bf16 %v573, %v573
        %v636 = vpack.c.bf16 %v575, %v575
        %v638 = vsel %vm327, %v633, 0
        %vm640 = vcmask 1043456
        %v642 = vsel %vm640, %v323, 0
        %644 = vmatprep.subr.bf16.mxu0 0
        %645 = vmatpush1.bf16.msra.mxu0 0
        %646 = vmatprep.subr.bf16.mxu0 0
        %647 = vmatpush1.bf16.msra.mxu0 0
        %648 = vmatprep.subr.bf16.mxu0 0
        %649 = vmatpush1.bf16.msra.mxu0 0
        %650 = vmatprep.subr.bf16.mxu0 0
        %651 = vmatpush1.bf16.msra.mxu0 0
        %652 = vmatprep.subr.bf16.mxu0 0
        %653 = vmatpush1.bf16.msra.mxu0 0
        %654 = vmatprep.subr.bf16.mxu0 0
        %655 = vmatpush1.bf16.msra.mxu0 0
        %656 = vmatprep.subr.bf16.mxu0 0
        %657 = vmatpush1.bf16.msra.mxu0 0
        %658 = vmatprep.subr.bf16.mxu0 0
        %659 = vmatpush1.bf16.msra.mxu0 %v642
        %660 = vmatprep.subr.bf16.mxu0 0
        %661 = vmatpush2.bf16.msra.mxu0 0
        %662 = vmatprep.subr.bf16.mxu0 0
        %663 = vmatpush2.bf16.msra.mxu0 0
        %664 = vmatprep.subr.bf16.mxu0 0
        %665 = vmatpush2.bf16.msra.mxu0 0
        %666 = vmatprep.subr.bf16.mxu0 0
        %667 = vmatpush2.bf16.msra.mxu0 0
        %668 = vmatprep.subr.bf16.mxu0 0
        %669 = vmatpush2.bf16.msra.mxu0 0
        %670 = vmatprep.subr.bf16.mxu0 0
        %671 = vmatpush2.bf16.msra.mxu0 0
        %672 = vmatprep.subr.bf16.mxu0 0
        %673 = vmatpush2.bf16.msra.mxu0 0
        %674 = vmatprep.subr.bf16.mxu0 0
        %675 = vmatpush2.bf16.msra.mxu0 0
        %676 = vmatprep.mubr.bf16.mxu0 0
        %677 = vmatmul.mubr.bf16.gmra.mxu0 %v638
        %v678 = vpop.f32.mrf.mxu0
        %v679 = vadd.f32 0.0, %v678
        %v680 = vpop.f32.mrf.mxu0
        %v681 = vpop.f32.mrf.mxu0
        %v682 = vpop.f32.mrf.mxu0
        %683 = vdwg.mxu0
        %v685 = vsel %vm327, %v634, 0
        %v688 = vsel %vm640, %v324, 0
        %690 = vmatprep.subr.bf16.mxu0 0
        %691 = vmatpush1.bf16.msra.mxu0 0
        %692 = vmatprep.subr.bf16.mxu0 0
        %693 = vmatpush1.bf16.msra.mxu0 0
        %694 = vmatprep.subr.bf16.mxu0 0
        %695 = vmatpush1.bf16.msra.mxu0 0
        %696 = vmatprep.subr.bf16.mxu0 0
        %697 = vmatpush1.bf16.msra.mxu0 0
        %698 = vmatprep.subr.bf16.mxu0 0
        %699 = vmatpush1.bf16.msra.mxu0 0
        %700 = vmatprep.subr.bf16.mxu0 0
        %701 = vmatpush1.bf16.msra.mxu0 0
        %702 = vmatprep.subr.bf16.mxu0 0
        %703 = vmatpush1.bf16.msra.mxu0 0
        %704 = vmatprep.subr.bf16.mxu0 0
        %705 = vmatpush1.bf16.msra.mxu0 %v688
        %706 = vmatprep.subr.bf16.mxu0 0
        %707 = vmatpush2.bf16.msra.mxu0 0
        %708 = vmatprep.subr.bf16.mxu0 0
        %709 = vmatpush2.bf16.msra.mxu0 0
        %710 = vmatprep.subr.bf16.mxu0 0
        %711 = vmatpush2.bf16.msra.mxu0 0
        %712 = vmatprep.subr.bf16.mxu0 0
        %713 = vmatpush2.bf16.msra.mxu0 0
        %714 = vmatprep.subr.bf16.mxu0 0
        %715 = vmatpush2.bf16.msra.mxu0 0
        %716 = vmatprep.subr.bf16.mxu0 0
        %717 = vmatpush2.bf16.msra.mxu0 0
        %718 = vmatprep.subr.bf16.mxu0 0
        %719 = vmatpush2.bf16.msra.mxu0 0
        %720 = vmatprep.subr.bf16.mxu0 0
        %721 = vmatpush2.bf16.msra.mxu0 0
        %722 = vmatprep.mubr.bf16.mxu0 0
        %723 = vmatmul.mubr.bf16.gmra.mxu0 %v685
        %v724 = vpop.f32.mrf.mxu0
        %v725 = vadd.f32 0.0, %v724
        %v726 = vpop.f32.mrf.mxu0
        %v727 = vpop.f32.mrf.mxu0
        %v728 = vpop.f32.mrf.mxu0
        %729 = vdwg.mxu0
        %v731 = vsel %vm327, %v635, 0
        %v734 = vsel %vm640, %v325, 0
        %736 = vmatprep.subr.bf16.mxu0 0
        %737 = vmatpush1.bf16.msra.mxu0 0
        %738 = vmatprep.subr.bf16.mxu0 0
        %739 = vmatpush1.bf16.msra.mxu0 0
        %740 = vmatprep.subr.bf16.mxu0 0
        %741 = vmatpush1.bf16.msra.mxu0 0
        %742 = vmatprep.subr.bf16.mxu0 0
        %743 = vmatpush1.bf16.msra.mxu0 0
        %744 = vmatprep.subr.bf16.mxu0 0
        %745 = vmatpush1.bf16.msra.mxu0 0
        %746 = vmatprep.subr.bf16.mxu0 0
        %747 = vmatpush1.bf16.msra.mxu0 0
        %748 = vmatprep.subr.bf16.mxu0 0
        %749 = vmatpush1.bf16.msra.mxu0 0
        %750 = vmatprep.subr.bf16.mxu0 0
        %751 = vmatpush1.bf16.msra.mxu0 %v734
        %752 = vmatprep.subr.bf16.mxu0 0
        %753 = vmatpush2.bf16.msra.mxu0 0
        %754 = vmatprep.subr.bf16.mxu0 0
        %755 = vmatpush2.bf16.msra.mxu0 0
        %756 = vmatprep.subr.bf16.mxu0 0
        %757 = vmatpush2.bf16.msra.mxu0 0
        %758 = vmatprep.subr.bf16.mxu0 0
        %759 = vmatpush2.bf16.msra.mxu0 0
        %760 = vmatprep.subr.bf16.mxu0 0
        %761 = vmatpush2.bf16.msra.mxu0 0
        %762 = vmatprep.subr.bf16.mxu0 0
        %763 = vmatpush2.bf16.msra.mxu0 0
        %764 = vmatprep.subr.bf16.mxu0 0
        %765 = vmatpush2.bf16.msra.mxu0 0
        %766 = vmatprep.subr.bf16.mxu0 0
        %767 = vmatpush2.bf16.msra.mxu0 0
        %768 = vmatprep.mubr.bf16.mxu0 0
        %769 = vmatmul.mubr.bf16.gmra.mxu0 %v731
        %v770 = vpop.f32.mrf.mxu0
        %v771 = vadd.f32 0.0, %v770
        %v772 = vpop.f32.mrf.mxu0
        %v773 = vpop.f32.mrf.mxu0
        %v774 = vpop.f32.mrf.mxu0
        %775 = vdwg.mxu0
        %v777 = vsel %vm327, %v636, 0
        %v780 = vsel %vm640, %v326, 0
        %782 = vmatprep.subr.bf16.mxu0 0
        %783 = vmatpush1.bf16.msra.mxu0 0
        %784 = vmatprep.subr.bf16.mxu0 0
        %785 = vmatpush1.bf16.msra.mxu0 0
        %786 = vmatprep.subr.bf16.mxu0 0
        %787 = vmatpush1.bf16.msra.mxu0 0
        %788 = vmatprep.subr.bf16.mxu0 0
        %789 = vmatpush1.bf16.msra.mxu0 0
        %790 = vmatprep.subr.bf16.mxu0 0
        %791 = vmatpush1.bf16.msra.mxu0 0
        %792 = vmatprep.subr.bf16.mxu0 0
        %793 = vmatpush1.bf16.msra.mxu0 0
        %794 = vmatprep.subr.bf16.mxu0 0
        %795 = vmatpush1.bf16.msra.mxu0 0
        %796 = vmatprep.subr.bf16.mxu0 0
        %797 = vmatpush1.bf16.msra.mxu0 %v780
        %798 = vmatprep.subr.bf16.mxu0 0
        %799 = vmatpush2.bf16.msra.mxu0 0
        %800 = vmatprep.subr.bf16.mxu0 0
        %801 = vmatpush2.bf16.msra.mxu0 0
        %802 = vmatprep.subr.bf16.mxu0 0
        %803 = vmatpush2.bf16.msra.mxu0 0
        %804 = vmatprep.subr.bf16.mxu0 0
        %805 = vmatpush2.bf16.msra.mxu0 0
        %806 = vmatprep.subr.bf16.mxu0 0
        %807 = vmatpush2.bf16.msra.mxu0 0
        %808 = vmatprep.subr.bf16.mxu0 0
        %809 = vmatpush2.bf16.msra.mxu0 0
        %810 = vmatprep.subr.bf16.mxu0 0
        %811 = vmatpush2.bf16.msra.mxu0 0
        %812 = vmatprep.subr.bf16.mxu0 0
        %813 = vmatpush2.bf16.msra.mxu0 0
        %814 = vmatprep.mubr.bf16.mxu0 0
        %815 = vmatmul.mubr.bf16.gmra.mxu0 %v777
        %v816 = vpop.f32.mrf.mxu0
        %v817 = vadd.f32 0.0, %v816
        %v818 = vpop.f32.mrf.mxu0
        %v819 = vpop.f32.mrf.mxu0
        %v820 = vpop.f32.mrf.mxu0
        %821 = vdwg.mxu0
        %v822 = vadd.f32 %v629, %v679
        %v823 = vadd.f32 %v630, %v725
        %v824 = vadd.f32 %v631, %v771
        %v825 = vadd.f32 %v632, %v817
        %826 = vst.msk [vmem:[#allocation4] sm:$0xff] %vm327, %v822
        %827 = vst.msk [vmem:[#allocation4 + $0x8] sm:$0xff] %vm327, %v823
        %828 = vst.msk [vmem:[#allocation4 + $0x10] sm:$0xff] %vm327, %v824
        %829 = vst.msk [vmem:[#allocation4 + $0x18] sm:$0xff] %vm327, %v825
        %830 = vst.msk [vmem:[#allocation2] sm:$0xff] %vm600, %v528
        %831 = vst.msk [vmem:[#allocation2 + $0x8] sm:$0xff] %vm600, %v529
        %832 = vst.msk [vmem:[#allocation2 + $0x10] sm:$0xff] %vm600, %v530
        %833 = vst.msk [vmem:[#allocation2 + $0x18] sm:$0xff] %vm600, %v531
        // Predicated region
        $region49: #{tpu_custom_call.1} parent=31 // pred_check
          %p834 = pneg %p297
        $region50: #{tpu_custom_call.1} parent=31 // pred_check_branch
          %836 = sbr.rel (%p834) target = $region52
        $region51: #{tpu_custom_call.1} parent=31 // pred_region
          %v837 = vld [vmem:[#allocation4] sm:$0xff]
          %v838 = vld [vmem:[#allocation4 + $0x8] sm:$0xff]
          %v839 = vld [vmem:[#allocation4 + $0x10] sm:$0xff]
          %v840 = vld [vmem:[#allocation4 + $0x18] sm:$0xff]
          %v841 = vld [vmem:[#allocation3] sm:$0xff]
          %v842 = vld [vmem:[#allocation3 + $0x8] sm:$0xff]
          %v843 = vld [vmem:[#allocation3 + $0x10] sm:$0xff]
          %v844 = vld [vmem:[#allocation3 + $0x18] sm:$0xff]
          %846 = vset.pattern.permute.xlu0 0
          %847 = vperm.xlu0 %846, %v841
          %v848 = vpop.permute.xlu0 %847
          %851 = vset.pattern.permute.xlu0 0
          %852 = vperm.xlu0 %851, %v842
          %v853 = vpop.permute.xlu0 %852
          %856 = vset.pattern.permute.xlu0 0
          %857 = vperm.xlu0 %856, %v843
          %v858 = vpop.permute.xlu0 %857
          %861 = vset.pattern.permute.xlu0 0
          %862 = vperm.xlu0 %861, %v844
          %v863 = vpop.permute.xlu0 %862
          %v865 = vrcp.pop %v848
          %v866 = vmul.f32 %v837, %v865
          %v867 = vrcp.pop %v853
          %v868 = vmul.f32 %v838, %v867
          %v869 = vrcp.pop %v858
          %v870 = vmul.f32 %v839, %v869
          %v871 = vrcp.pop %v863
          %v872 = vmul.f32 %v840, %v871
          %873 = vst.msk [vmem:[%s295] sm:$0xff] %vm327, %v866
          %874 = vst.msk [vmem:[%s295 + $0x8] sm:$0xff] %vm327, %v868
          %875 = vst.msk [vmem:[%s295 + $0x10] sm:$0xff] %vm327, %v870
          %876 = vst.msk [vmem:[%s295 + $0x18] sm:$0xff] %vm327, %v872
        $region52: #{tpu_custom_call.1} parent=31 // pred_fallthru
          _
        %s877 = sand.u32 %s136, 1
        %s878 = scalar_lea.sflag [#allocation7], %s877
        %s879 = sand.u32 %s136, 1
        %s880 = smul.addr %s879, 32
        %s881 = scalar_lea.vmem [#allocation11], %s880
        // Predicated region
        $region53: #{tpu_custom_call.1} parent=31 // pred_check
          %p882 = pneg %p146
        $region54: #{tpu_custom_call.1} parent=31 // pred_check_branch
          %884 = sbr.rel (%p882) target = $region56
        $region55: #{tpu_custom_call.1} parent=31 // pred_region
          %s886 = ssub.s32 512, 512
          %887 = vsyncadd %s878, %s886
          %s888 = smul.addr %s28, 4
          %s889 = sadd.s32 %s29, %s888
          %s890 = smul.addr %s889, 128
          %s891 = scalar_lea.hbm %s3, %s890
          %s892 = sshll.u32 %s881, 4
          %s893 = int_to_ptr.vmem [resolvable:$true] %s892
          %898 = dma.vmem_to_hbm [thread:$0]  %s893, 512, %s891, %s878, 128, 128, 8
        $region56: #{tpu_custom_call.1} parent=31 // pred_fallthru
          _
      $region32: #{tpu_custom_call.1} parent=5 // pred_fallthru
        _
      %p899 = scmp.le.s32.totalorder 2, %s18
      // Predicated region
      $region57: #{tpu_custom_call.1} parent=5 // pred_check
        %p900 = pneg %p899
      $region58: #{tpu_custom_call.1} parent=5 // pred_check_branch
        %902 = sbr.rel (%p900) target = $region60
      $region59: #{tpu_custom_call.1} parent=5 // pred_region
        %s903 = ssub.s32 %s18, 2
        // Predicated region
        $region61: #{tpu_custom_call.1} parent=59 // pred_check
          %p904 = pneg %p152
        $region62: #{tpu_custom_call.1} parent=59 // pred_check_branch
          %906 = sbr.rel (%p904) target = $region64
        $region63: #{tpu_custom_call.1} parent=59 // pred_region
          %s907 = sand.u32 %s137, 1
          %s908 = scalar_lea.sflag [#allocation7], %s907
          %s909 = sand.u32 %s137, 1
          %s910 = smul.addr %s909, 32
          %s911 = scalar_lea.vmem [#allocation11], %s910
          %912 = dma.done %s908, 512
        $region64: #{tpu_custom_call.1} parent=59 // pred_fallthru
          _
      $region60: #{tpu_custom_call.1} parent=5 // pred_fallthru
        _
    $region6: #{tpu_custom_call.1} parent=1 // loop_footer
      %s22 = sadd.s32 1, %s18
    $region7: #{tpu_custom_call.1} parent=1 // loop_footer_branch
      %17 = sbr.rel target = $region3
    $region8: #{tpu_custom_call.1} parent=1 // loop_exit
      _
    %913 = vsyncpa [#allocation6], 1
    %s914 = scalar_lea.sflag [#allocation6], 1
    %915 = vsyncpa %s914, 1
    %916 = vsyncpa [#allocation9], 1
    %s917 = scalar_lea.sflag [#allocation9], 1
    %918 = vsyncpa %s917, 1
    %919 = vsyncpa [#allocation7], 1
    %s920 = scalar_lea.sflag [#allocation7], 1
    %921 = vsyncpa %s920, 1

</llo_original>
